<compile_context>
chip_gen: v7x
topology: tpu7x:2x2x1
jax: 0.10.0
libtpu: 0.0.40
codegen_flags: <defaults>
</compile_context>

<pallas_src>
import jax
import jax.numpy as jnp
from jax.experimental import pallas as pl
from jax.experimental.pallas import tpu as pltpu


_EPS = 1e-12  # F.normalize default eps; x / max(||x||, eps) == x * rsqrt(max(||x||^2, eps^2))


def _round_up(x, m):
    return ((x + m - 1) // m) * m


def _fused_normed_matmul_kernel(x_ref, w_ref, o_ref):
    """Fused body: row-normalize x tile, column-normalize w tile, MXU matmul.

    x_ref: (TB, D), w_ref: (D, TC), o_ref: (TB, TC).  D is the full feature
    dim, so the per-tile norms are exact.  rsqrt hits the EUP slot, the scaling
    multiplies the VALU slot; both hide under the MXU / DMA bound.
    """
    x = x_ref[...].astype(jnp.float32)
    w = w_ref[...].astype(jnp.float32)

    row_inv = jax.lax.rsqrt(jnp.maximum(jnp.sum(x * x, axis=1, keepdims=True),
                                        _EPS * _EPS))
    col_inv = jax.lax.rsqrt(jnp.maximum(jnp.sum(w * w, axis=0, keepdims=True),
                                        _EPS * _EPS))

    xn = x * row_inv          # TB*D multiplies
    wn = w * col_inv          # D*TC multiplies (cheaper than post-scaling TB*TC)

    o_ref[...] = jnp.dot(
        xn, wn, preferred_element_type=jnp.float32
    ).astype(o_ref.dtype)


def normed_linear_classifier(x, weight, *, tb_max=512, tc_max=1024):
    """x: (B, feat_dim) f32, weight: (feat_dim, num_classes) f32 -> (B, num_classes) f32."""
    B, D = x.shape
    D2, C = weight.shape
    assert D == D2

    # --- tile plan: lane/sublane aligned; ragged last tiles handled by Pallas ---
    TB = min(tb_max, _round_up(B, 8))      # sublane multiple of 8
    TC = min(tc_max, _round_up(C, 128))    # lane multiple of 128 (lane-dense stores)
    grid = (pl.cdiv(B, TB), pl.cdiv(C, TC))

    # Double-buffered VMEM footprint of one grid step + headroom; cap well
    # below v7x's 64 MiB physical VMEM (leave room for compiler scratch).
    vmem_needed = 2 * 4 * (TB * D + D * TC + TB * TC)
    vmem_limit = int(min(max(vmem_needed + (4 << 20), 32 << 20), 48 << 20))

    out = pl.pallas_call(
        _fused_normed_matmul_kernel,
        out_shape=jax.ShapeDtypeStruct((B, C), jnp.float32),
        grid_spec=pltpu.PrefetchScalarGridSpec(
            num_scalar_prefetch=0,
            grid=grid,
            in_specs=[
                pl.BlockSpec((TB, D), lambda i, j: (i, 0)),
                pl.BlockSpec((D, TC), lambda i, j: (0, j)),
            ],
            out_specs=pl.BlockSpec((TB, TC), lambda i, j: (i, j)),
        ),
        compiler_params=pltpu.CompilerParams(
            dimension_semantics=("parallel", "parallel"),
            vmem_limit_bytes=vmem_limit,
        ),
        cost_estimate=pl.CostEstimate(
            flops=2 * B * D * C,
            # x is re-read once per class tile, w once per batch tile.
            bytes_accessed=4 * (grid[1] * B * D + grid[0] * D * C + B * C),
            transcendentals=grid[1] * B + grid[0] * C,   # rsqrt per tile recompute
        ),
    )(x, weight)

    return out


def init_weight(key, feat_dim=64, num_classes=100):
    """Replicates: Tensor(feat_dim, num_classes).uniform_(-1,1).renorm_(2,1,1e-5).mul_(1e5)."""
    w = jax.random.uniform(
        key, (feat_dim, num_classes), dtype=jnp.float32, minval=-1.0, maxval=1.0
    )
    # renorm_(p=2, dim=1, maxnorm=1e-5): scale each column whose L2 norm exceeds
    # maxnorm down to maxnorm.
    col_norm = jnp.sqrt(jnp.sum(w * w, axis=0, keepdims=True))
    scale = jnp.where(col_norm > 1e-5, 1e-5 / (col_norm + 1e-7), 1.0)
    w = w * scale
    w = w * 1e5
    return w


def reference(x, weight):
    xn = x / jnp.maximum(jnp.linalg.norm(x, axis=1, keepdims=True), 1e-12)
    wn = weight / jnp.maximum(jnp.linalg.norm(weight, axis=0, keepdims=True), 1e-12)
    return xn @ wn


if __name__ == "__main__":
    num_classes = 100
    feat_dim = 64
    batch = 8

    key = jax.random.PRNGKey(0)
    kx, kw = jax.random.split(key)

    x = jax.random.normal(kx, (batch, feat_dim), dtype=jnp.float32)
    weight = init_weight(kw, feat_dim=feat_dim, num_classes=num_classes)

    fwd = jax.jit(normed_linear_classifier)
    out = fwd(x, weight)
    out = jax.block_until_ready(out)

    ref = reference(x, weight)
    assert out.shape == (batch, num_classes)
    assert jnp.allclose(out, ref, atol=1e-5, rtol=1e-5), (
        f"max abs err = {jnp.max(jnp.abs(out - ref))}"
    )

    print("KERNEL_OK")
</pallas_src>

<mosaic_0001>
module attributes {stable_mosaic.version = 11 : i64} {
  func.func @_fused_normed_matmul_kernel(%arg0: i32, %arg1: i32, %arg2: memref<8x64xf32, #tpu.memory_space<vmem>>, %arg3: memref<64x128xf32, #tpu.memory_space<vmem>>, %arg4: memref<8x128xf32, #tpu.memory_space<vmem>>) attributes {dimension_semantics = [#tpu.dimension_semantics<parallel>, #tpu.dimension_semantics<parallel>], iteration_bounds = array<i64: 1, 1>, scalar_prefetch = 0 : i64, scratch_operands = 0 : i64, tpu.core_type = #tpu.core_type<tc>, window_params = [{transform_indices = @transform_0, window_bounds = array<i64: 8, 64>}, {transform_indices = @transform_1, window_bounds = array<i64: 64, 128>}, {transform_indices = @transform_2, window_bounds = array<i64: 8, 128>}]} {
    %c0 = arith.constant 0 : index
    %c0_0 = arith.constant 0 : index
    %0 = vector.load %arg2[%c0, %c0_0] : memref<8x64xf32, #tpu.memory_space<vmem>>, vector<8x64xf32>
    %c0_1 = arith.constant 0 : index
    %c0_2 = arith.constant 0 : index
    %1 = vector.load %arg3[%c0_1, %c0_2] : memref<64x128xf32, #tpu.memory_space<vmem>>, vector<64x128xf32>
    %2 = arith.mulf %0, %0 : vector<8x64xf32>
    %cst = arith.constant dense<0.000000e+00> : vector<8xf32>
    %3 = vector.multi_reduction <add>, %2, %cst [1] : vector<8x64xf32> to vector<8xf32>
    %4 = vector.shape_cast %3 : vector<8xf32> to vector<8x1xf32>
    %cst_3 = arith.constant 1.000000e-24 : f32
    %5 = vector.broadcast %cst_3 : f32 to vector<8x1xf32>
    %6 = arith.maximumf %4, %5 : vector<8x1xf32>
    %7 = math.rsqrt %6 : vector<8x1xf32>
    %8 = arith.mulf %1, %1 : vector<64x128xf32>
    %cst_4 = arith.constant dense<0.000000e+00> : vector<128xf32>
    %9 = vector.multi_reduction <add>, %8, %cst_4 [0] : vector<64x128xf32> to vector<128xf32>
    %10 = vector.shape_cast %9 : vector<128xf32> to vector<1x128xf32>
    %cst_5 = arith.constant 1.000000e-24 : f32
    %11 = vector.broadcast %cst_5 : f32 to vector<1x128xf32>
    %12 = arith.maximumf %10, %11 : vector<1x128xf32>
    %13 = math.rsqrt %12 : vector<1x128xf32>
    %14 = vector.broadcast %7 : vector<8x1xf32> to vector<8x64xf32>
    %15 = arith.mulf %0, %14 : vector<8x64xf32>
    %16 = vector.broadcast %13 : vector<1x128xf32> to vector<64x128xf32>
    %17 = arith.mulf %1, %16 : vector<64x128xf32>
    %cst_6 = arith.constant dense<0.000000e+00> : vector<8x128xf32>
    %18 = tpu.matmul %15, %17, %cst_6 {dimension_numbers = #tpu.dot_dimension_numbers<[1], [0], [0], [1], [0, 0, 1, 1], [], []>} : vector<8x64xf32>, vector<64x128xf32>, vector<8x128xf32> -> vector<8x128xf32>
    %c0_7 = arith.constant 0 : index
    %c0_8 = arith.constant 0 : index
    %19 = vector.load %arg4[%c0_7, %c0_8] : memref<8x128xf32, #tpu.memory_space<vmem>>, vector<8x128xf32>
    tpu.vector_store %arg4[%c0_7, %c0_8], %18 {strides = array<i32>} : memref<8x128xf32, #tpu.memory_space<vmem>>, vector<8x128xf32>,
    return
  }
  func.func @transform_0(%arg0: i32, %arg1: i32) -> (i32, i32) {
    %c0_i32 = arith.constant 0 : i32
    %c0_i32_0 = arith.constant 0 : i32
    return %arg0, %c0_i32 : i32, i32
  }
  func.func @transform_1(%arg0: i32, %arg1: i32) -> (i32, i32) {
    %c0_i32 = arith.constant 0 : i32
    %c0_i32_0 = arith.constant 0 : i32
    return %c0_i32, %arg1 : i32, i32
  }
  func.func @transform_2(%arg0: i32, %arg1: i32) -> (i32, i32) {
    %c0_i32 = arith.constant 0 : i32
    return %arg0, %arg1 : i32, i32
  }
}

</mosaic_0001>

<llo_original>
// kernel: normed_linear_classifier.1
$region0: #{normed_linear_classifier.1}
  #allocation0 [shape = 'u32[]', space=smem, size = 0x4, offset = 0x4, fixed_abs, tag = 'smem constant byte address 0x4 - core index']
  #allocation1 [shape = 'u32[144,128]{1,0:T(1,128)}', space=vmem, size = 0x12000, scoped, tag = 'internal scratch']
  %s0 = inlined_call_operand.hbm [shape: f32[8,64], index: 0, kind: input, shape index: {}]
  %s1 = inlined_call_operand.hbm [shape: f32[64,100], index: 1, kind: input, shape index: {}]
  %s2 = inlined_call_operand.hbm [shape: f32[8,100], index: 2, kind: output, shape index: {}]
  %s3 = sld [smem:[#allocation0]]
  $region26: #{normed_linear_classifier.1} parent=0
    _
  %s5 = ssub.s32 1, %s3
  %s6 = scalar_select 0, %s5, %s3
  $region1: #{normed_linear_classifier.1} parent=0
    #allocation2 [shape = 'u8[4096]{0}', space=vmem, size = 0x1000, scoped, tag = 'input window, operand 0, single buffered']
    #allocation3 [shape = 's32[1]{0}', space=sflag, size = 0x4, scoped, tag = 'scoped memory for normed_linear_classifier.1']
    #allocation4 [shape = 's32[1]{0}', space=sflag, size = 0x4, scoped, tag = 'scoped memory for normed_linear_classifier.1']
    #allocation5 [shape = 'u8[32768]{0}', space=vmem, size = 0x8000, scoped, tag = 'input window, operand 1, single buffered']
    #allocation6 [shape = 's32[1]{0}', space=sflag, size = 0x4, scoped, tag = 'scoped memory for normed_linear_classifier.1']
    #allocation7 [shape = 'u8[4096]{0}', space=vmem, size = 0x1000, scoped, tag = 'output window, operand 0, single buffered']
    %7 = vsyncpa [#allocation3], 0
    %8 = vsyncpa [#allocation6], 0
    %9 = vsyncpa [#allocation4], 0
    // Predicated region
    $region2: #{normed_linear_classifier.1} parent=1 // pred_check
      _
    $region3: #{normed_linear_classifier.1} parent=1 // pred_check_branch
      %11 = sbr.rel (0) target = $region5
    $region4: #{normed_linear_classifier.1} parent=1 // pred_region
      %s13 = ssub.s32 128, 128
      %14 = vsyncadd [#allocation3], %s13
      %s16 = sshll.u32 [#allocation2], 4
      %s17 = int_to_ptr.vmem [resolvable:$true] %s16
      %19 = dma.hbm_to_vmem [thread:$0]  %s0, 128, %s17, [#allocation3]
    $region5: #{normed_linear_classifier.1} parent=1 // pred_fallthru
      _
    // Predicated region
    $region6: #{normed_linear_classifier.1} parent=1 // pred_check
      _
    $region7: #{normed_linear_classifier.1} parent=1 // pred_check_branch
      %21 = sbr.rel (0) target = $region9
    $region8: #{normed_linear_classifier.1} parent=1 // pred_region
      %s23 = ssub.s32 1024, 1024
      %24 = vsyncadd [#allocation6], %s23
      %s25 = sshll.u32 [#allocation5], 4
      %s26 = int_to_ptr.vmem [resolvable:$true] %s25
      %31 = dma.hbm_to_vmem [thread:$0]  %s1, 1024, %s26, [#allocation6], 128, 128, 8
    $region9: #{normed_linear_classifier.1} parent=1 // pred_fallthru
      _
    // Predicated region
    $region10: #{normed_linear_classifier.1} parent=1 // pred_check
      _
    $region11: #{normed_linear_classifier.1} parent=1 // pred_check_branch
      %33 = sbr.rel (0) target = $region13
    $region12: #{normed_linear_classifier.1} parent=1 // pred_region
      %34 = dma.done [#allocation3], 128
    $region13: #{normed_linear_classifier.1} parent=1 // pred_fallthru
      _
    // Predicated region
    $region14: #{normed_linear_classifier.1} parent=1 // pred_check
      _
    $region15: #{normed_linear_classifier.1} parent=1 // pred_check_branch
      %36 = sbr.rel (0) target = $region17
    $region16: #{normed_linear_classifier.1} parent=1 // pred_region
      %37 = dma.done [#allocation6], 1024
    $region17: #{normed_linear_classifier.1} parent=1 // pred_fallthru
      _
    %v38 = vld [vmem:[#allocation2] sm:$0xff]
    %v39 = vld [vmem:[#allocation5] sm:$0xff]
    %v40 = vld [vmem:[#allocation5 + $0x8] sm:$0xff]
    %v41 = vld [vmem:[#allocation5 + $0x10] sm:$0xff]
    %v42 = vld [vmem:[#allocation5 + $0x18] sm:$0xff]
    %v43 = vld [vmem:[#allocation5 + $0x20] sm:$0xff]
    %v44 = vld [vmem:[#allocation5 + $0x28] sm:$0xff]
    %v45 = vld [vmem:[#allocation5 + $0x30] sm:$0xff]
    %v46 = vld [vmem:[#allocation5 + $0x38] sm:$0xff]
    %v47 = vmul.f32 %v38, %v38
    %vm48 = vcmask 523264
    %v49 = vsel %vm48, %v47, 0.0
    %50 = vadd.xlane.f32.xlu0 %v49
    %v51 = vpop.xlane.xlu0 %50
    %v52 = vmax.f32 %v51, 1e-24
    %v53 = vrsqrt.pop %v52
    %v54 = vmul.f32 %v39, %v39
    %v55 = vmul.f32 %v40, %v40
    %v56 = vmul.f32 %v41, %v41
    %v57 = vmul.f32 %v42, %v42
    %v58 = vmul.f32 %v43, %v43
    %v59 = vmul.f32 %v44, %v44
    %v60 = vmul.f32 %v45, %v45
    %v61 = vmul.f32 %v46, %v46
    %v62 = vadd.f32 %v54, %v55
    %v63 = vadd.f32 %v62, %v56
    %v64 = vadd.f32 %v63, %v57
    %v65 = vadd.f32 %v64, %v58
    %v66 = vadd.f32 %v65, %v59
    %v67 = vadd.f32 %v66, %v60
    %v68 = vadd.f32 %v67, %v61
    %v69 = vrot.slane %v68, 4
    %v70 = vadd.f32 %v68, %v69
    %v71 = vrot.slane %v70, 2
    %v72 = vadd.f32 %v70, %v71
    %v73 = vrot.slane %v72, 1
    %v74 = vadd.f32 %v72, %v73
    %v75 = vmax.f32 %v74, 1e-24
    %v76 = vrsqrt.pop %v75
    %v77 = vmul.f32 %v38, %v53
    %v78 = vmul.f32 %v39, %v76
    %v79 = vmul.f32 %v40, %v76
    %v80 = vmul.f32 %v41, %v76
    %v81 = vmul.f32 %v42, %v76
    %v82 = vmul.f32 %v43, %v76
    %v83 = vmul.f32 %v44, %v76
    %v84 = vmul.f32 %v45, %v76
    %v85 = vmul.f32 %v46, %v76
    %v87 = vsel %vm48, %v77, 0
    %89 = vmatprep.subr.mxu0 0.0
    %90 = vmatpush1.msra.mxu0 %v78
    %91 = vmatprep.subr.mxu0 0.0
    %92 = vmatpush1.msra.mxu0 %v79
    %93 = vmatprep.subr.mxu0 0.0
    %94 = vmatpush1.msra.mxu0 %v80
    %95 = vmatprep.subr.mxu0 0.0
    %96 = vmatpush1.msra.mxu0 %v81
    %97 = vmatprep.subr.mxu0 0.0
    %98 = vmatpush1.msra.mxu0 %v82
    %99 = vmatprep.subr.mxu0 0.0
    %100 = vmatpush1.msra.mxu0 %v83
    %101 = vmatprep.subr.mxu0 0.0
    %102 = vmatpush1.msra.mxu0 %v84
    %103 = vmatprep.subr.mxu0 0.0
    %104 = vmatpush1.msra.mxu0 %v85
    %105 = vmatprep.subr.mxu0 0.0
    %106 = vmatpush1.msra.mxu0 0.0
    %107 = vmatprep.subr.mxu0 0.0
    %108 = vmatpush1.msra.mxu0 0.0
    %109 = vmatprep.subr.mxu0 0.0
    %110 = vmatpush1.msra.mxu0 0.0
    %111 = vmatprep.subr.mxu0 0.0
    %112 = vmatpush1.msra.mxu0 0.0
    %113 = vmatprep.subr.mxu0 0.0
    %114 = vmatpush1.msra.mxu0 0.0
    %115 = vmatprep.subr.mxu0 0.0
    %116 = vmatpush1.msra.mxu0 0.0
    %117 = vmatprep.subr.mxu0 0.0
    %118 = vmatpush1.msra.mxu0 0.0
    %119 = vmatprep.subr.mxu0 0.0
    %120 = vmatpush1.msra.mxu0 0.0
    %121 = vmatprep.subr.mxu0 0.0
    %122 = vmatpush1.msra.mxu0 0.0
    %123 = vmatprep.subr.mxu0 0.0
    %124 = vmatpush1.msra.mxu0 0.0
    %125 = vmatprep.subr.mxu0 0.0
    %126 = vmatpush1.msra.mxu0 0.0
    %127 = vmatprep.subr.mxu0 0.0
    %128 = vmatpush1.msra.mxu0 0.0
    %129 = vmatprep.subr.mxu0 0.0
    %130 = vmatpush1.msra.mxu0 0.0
    %131 = vmatprep.subr.mxu0 0.0
    %132 = vmatpush1.msra.mxu0 0.0
    %133 = vmatprep.subr.mxu0 0.0
    %134 = vmatpush1.msra.mxu0 0.0
    %135 = vmatprep.subr.mxu0 0.0
    %136 = vmatpush1.msra.mxu0 0.0
    %137 = vmatprep.subr.mxu0 0.0
    %138 = vmatpush1.msra.mxu0 0.0
    %139 = vmatprep.subr.mxu0 0.0
    %140 = vmatpush1.msra.mxu0 0.0
    %141 = vmatprep.subr.mxu0 0.0
    %142 = vmatpush1.msra.mxu0 0.0
    %143 = vmatprep.subr.mxu0 0.0
    %144 = vmatpush1.msra.mxu0 0.0
    %145 = vmatprep.subr.mxu0 0.0
    %146 = vmatpush1.msra.mxu0 0.0
    %147 = vmatprep.subr.mxu0 0.0
    %148 = vmatpush1.msra.mxu0 0.0
    %149 = vmatprep.subr.mxu0 0.0
    %150 = vmatpush1.msra.mxu0 0.0
    %151 = vmatprep.subr.mxu0 0.0
    %152 = vmatpush1.msra.mxu0 0.0
    %153 = vmatprep.mubr.f32.mxu0 0.0
    %154 = vmatmul.mubr.f32.gmra.mrb[0].mxu0 %v87
    %v155 = vpop.f32.mrb[0].mxu0
    %v156 = vadd.f32 0.0, %v155
    %v157 = vpop.f32.mrb[0].mxu0
    %158 = vdwg.mxu0
    %159 = vst [vmem:[#allocation7] sm:$0xff] %v156
    // Predicated region
    $region18: #{normed_linear_classifier.1} parent=1 // pred_check
      _
    $region19: #{normed_linear_classifier.1} parent=1 // pred_check_branch
      %161 = sbr.rel (0) target = $region21
    $region20: #{normed_linear_classifier.1} parent=1 // pred_region
      %s163 = ssub.s32 128, 128
      %164 = vsyncadd [#allocation4], %s163
      %s166 = sshll.u32 [#allocation7], 4
      %s167 = int_to_ptr.vmem [resolvable:$true] %s166
      %169 = dma.vmem_to_hbm [thread:$0]  %s167, 128, %s2, [#allocation4]
    $region21: #{normed_linear_classifier.1} parent=1 // pred_fallthru
      _
    // Predicated region
    $region22: #{normed_linear_classifier.1} parent=1 // pred_check
      _
    $region23: #{normed_linear_classifier.1} parent=1 // pred_check_branch
      %171 = sbr.rel (0) target = $region25
    $region24: #{normed_linear_classifier.1} parent=1 // pred_region
      %172 = dma.done [#allocation4], 128
    $region25: #{normed_linear_classifier.1} parent=1 // pred_fallthru
      _
    %173 = vsyncpa [#allocation3], 1
    %174 = vsyncpa [#allocation6], 1
    %175 = vsyncpa [#allocation4], 1

</llo_original>
